<compile_context>
chip_gen: v7x
topology: tpu7x:2x2x1
jax: 0.10.0
libtpu: 0.0.40
codegen_flags: <defaults>
</compile_context>

<pallas_src>
import functools

import jax
import jax.numpy as jnp
from jax.experimental import pallas as pl
from jax.experimental.pallas import tpu as pltpu

_EPS = 1e-6  # torch.nn.functional.pairwise_distance default eps


def _round_up(x, m):
    return ((x + m - 1) // m) * m


def _triplet_loss_kernel(a_ref, p_ref, n_ref, acc_ref, *,
                         margin, batch, tile_b, tiles_per_core, needs_mask):
    c = pl.program_id(0)   # "parallel" axis (megacore split on v7x)
    t = pl.program_id(1)   # "arbitrary" reduction axis over batch tiles

    @pl.when(t == 0)
    def _init():
        acc_ref[...] = jnp.zeros_like(acc_ref)

    a = a_ref[...].astype(jnp.float32)
    p = p_ref[...].astype(jnp.float32)
    n = n_ref[...].astype(jnp.float32)

    # torch pairwise_distance adds eps element-wise to the difference.
    dp = a - p + _EPS
    dn = a - n + _EPS

    # Positive branch: 0.5 * ||dp||^2 == 0.5 * sum(dp*dp); no sqrt needed.
    pos_loss = 0.5 * jnp.sum(dp * dp, axis=-1, keepdims=True)        # (tb, 1)

    neg_sq = jnp.sum(dn * dn, axis=-1, keepdims=True)                # (tb, 1)
    neg_dist = jnp.sqrt(neg_sq)
    hinge = jnp.maximum(margin - neg_dist, 0.0)
    neg_loss = 0.5 * hinge * hinge

    contrib = pos_loss + neg_loss                                    # (tb, 1)

    if needs_mask:
        tile_start = (c * tiles_per_core + t) * tile_b
        is_full = tile_start + tile_b <= batch

        @pl.when(is_full)
        def _interior():
            acc_ref[...] += contrib

        @pl.when(jnp.logical_not(is_full))
        def _tail():
            # Rows beyond the real batch (clipped / redundant tail blocks) hold
            # unspecified data; the select zeroes their contribution.
            row = tile_start + jax.lax.broadcasted_iota(
                jnp.int32, (tile_b, 1), 0)
            acc_ref[...] += jnp.where(row < batch, contrib, 0.0)
    else:
        acc_ref[...] += contrib


def triplet_loss(anchor_emb, pos_emb, neg_emb, margin=1.0):
    assert anchor_emb.shape == pos_emb.shape == neg_emb.shape
    assert anchor_emb.ndim == 2
    B, D = anchor_emb.shape
    itemsize = jnp.dtype(anchor_emb.dtype).itemsize

    # ---- generation dispatch (1 TC on v5e/v6e, 2 TCs on v7x) --------------
    try:
        kind = jax.devices()[0].device_kind.lower()
    except Exception:  # pragma: no cover -非-TPU fallback
        kind = ""
    is_v7x = ("v7" in kind) or ("7x" in kind)
    num_cores = 2 if is_v7x else 1

    # ---- batch tile: byte target (~4 MiB per input block), sublane multiple
    sub = 8 * max(1, 4 // itemsize)          # 8 rows f32, 16 rows bf16, ...
    row_bytes = D * itemsize
    per_block_target = 4 * 1024 * 1024       # bytes per (tb, D) input block
    per_core_rows = _round_up(pl.cdiv(B, num_cores), sub)
    tb = max(sub, (per_block_target // max(row_bytes, 1)) // sub * sub)
    tb = min(tb, per_core_rows)
    tb = max(tb, sub)

    total_tiles = pl.cdiv(B, tb)
    num_cores = min(num_cores, total_tiles)   # no empty cores
    tiles_per_core = pl.cdiv(total_tiles, num_cores)
    needs_mask = (num_cores * tiles_per_core * tb != B)
    last_block = total_tiles - 1

    # ---- VMEM budget: 3 inputs x double buffer, generation-aware cap ------
    in_block_bytes = 3 * 2 * tb * D * itemsize
    vmem_cap = (48 if is_v7x else 64) * 1024 * 1024
    vmem_limit = int(min(vmem_cap,
                         max(32 * 1024 * 1024, in_block_bytes + (8 << 20))))

    kernel = functools.partial(
        _triplet_loss_kernel, margin=float(margin), batch=B, tile_b=tb,
        tiles_per_core=tiles_per_core, needs_mask=needs_mask)

    def in_map(c, t):
        # Clamp so redundant trailing grid steps (when coverage > total_tiles)
        # re-read the last valid block instead of issuing an OOB DMA; their
        # contribution is fully masked in-kernel.
        return (jnp.minimum(c * tiles_per_core + t, last_block), 0)

    in_spec = pl.BlockSpec((tb, D), in_map)

    partials = pl.pallas_call(
        kernel,
        out_shape=jax.ShapeDtypeStruct((num_cores * tb, 1), jnp.float32),
        grid=(num_cores, tiles_per_core),
        in_specs=[in_spec, in_spec, in_spec],
        # Output block index constant across the reduction axis => acts as a
        # per-core VMEM-resident vector accumulator.
        out_specs=pl.BlockSpec((tb, 1), lambda c, t: (c, 0)),
        compiler_params=pltpu.CompilerParams(
            dimension_semantics=("parallel", "arbitrary"),
            vmem_limit_bytes=vmem_limit,
        ),
        cost_estimate=pl.CostEstimate(
            flops=8 * B * D,
            transcendentals=B,
            bytes_accessed=3 * B * D * itemsize + num_cores * tb * 4,
        ),
    )(anchor_emb, pos_emb, neg_emb)

    # Single tiny host-side reduce of the per-row partials; mean folded in.
    return jnp.sum(partials) * (1.0 / B)


def _reference(anchor, pos, neg, margin=1.0):
    # Pure-JAX reference mirroring the PyTorch module.
    pos_dist = jnp.sqrt(jnp.sum((anchor - pos + _EPS) ** 2, axis=-1))
    neg_dist = jnp.sqrt(jnp.sum((anchor - neg + _EPS) ** 2, axis=-1))
    pos_loss = 0.5 * pos_dist ** 2
    neg_loss = 0.5 * jnp.clip(margin - neg_dist, 0.0) ** 2
    return jnp.mean(pos_loss) + jnp.mean(neg_loss)


if __name__ == "__main__":
    key = jax.random.PRNGKey(0)
    k_a, k_p, k_n = jax.random.split(key, 3)

    # Small shapes consistent with the module: (batch, embedding_dim).
    B, D = 8, 32
    anchor = jax.random.normal(k_a, (B, D), dtype=jnp.float32)
    pos = jax.random.normal(k_p, (B, D), dtype=jnp.float32)
    neg = jax.random.normal(k_n, (B, D), dtype=jnp.float32)

    loss = jax.block_until_ready(triplet_loss(anchor, pos, neg, margin=1.0))
    ref = jax.block_until_ready(_reference(anchor, pos, neg, margin=1.0))
    assert jnp.allclose(loss, ref, atol=1e-5, rtol=1e-5), (loss, ref)

    # Ragged batch (exercises the in-kernel tail-mask path; no host padding).
    B2 = 13
    a2 = jax.random.normal(k_a, (B2, D), dtype=jnp.float32)
    p2 = jax.random.normal(k_p, (B2, D), dtype=jnp.float32)
    n2 = jax.random.normal(k_n, (B2, D), dtype=jnp.float32)
    loss2 = jax.block_until_ready(triplet_loss(a2, p2, n2, margin=1.0))
    ref2 = jax.block_until_ready(_reference(a2, p2, n2, margin=1.0))
    assert jnp.allclose(loss2, ref2, atol=1e-5, rtol=1e-5), (loss2, ref2)

    print("KERNEL_OK")
</pallas_src>

<mosaic_0001>
module attributes {stable_mosaic.version = 11 : i64} {
  func.func @_triplet_loss_kernel(%arg0: i32, %arg1: i32, %arg2: memref<8x32xf32, #tpu.memory_space<vmem>>, %arg3: memref<8x32xf32, #tpu.memory_space<vmem>>, %arg4: memref<8x32xf32, #tpu.memory_space<vmem>>, %arg5: memref<8x1xf32, #tpu.memory_space<vmem>>) attributes {dimension_semantics = [#tpu.dimension_semantics<parallel>, #tpu.dimension_semantics<arbitrary>], iteration_bounds = array<i64: 1, 1>, scalar_prefetch = 0 : i64, scratch_operands = 0 : i64, tpu.core_type = #tpu.core_type<tc>, window_params = [{transform_indices = @transform_0, window_bounds = array<i64: 8, 32>}, {transform_indices = @transform_1, window_bounds = array<i64: 8, 32>}, {transform_indices = @transform_2, window_bounds = array<i64: 8, 32>}, {transform_indices = @transform_3, window_bounds = array<i64: 8, 1>}]} {
    %c0_i32 = arith.constant 0 : i32
    %0 = arith.cmpi eq, %arg1, %c0_i32 : i32
    %1 = arith.extui %0 : i1 to i32
    %c0_i32_0 = arith.constant 0 : i32
    %2 = arith.cmpi ne, %1, %c0_i32_0 : i32
    scf.if %2 {
      %cst_17 = arith.constant 0.000000e+00 : f32
      %32 = vector.broadcast %cst_17 : f32 to vector<8x1xf32>
      %c0_18 = arith.constant 0 : index
      %c0_19 = arith.constant 0 : index
      %33 = vector.load %arg5[%c0_18, %c0_19] : memref<8x1xf32, #tpu.memory_space<vmem>>, vector<8x1xf32>
      tpu.vector_store %arg5[%c0_18, %c0_19], %32 {strides = array<i32>} : memref<8x1xf32, #tpu.memory_space<vmem>>, vector<8x1xf32>,
    } else {
    }
    %c0 = arith.constant 0 : index
    %c0_1 = arith.constant 0 : index
    %3 = vector.load %arg2[%c0, %c0_1] : memref<8x32xf32, #tpu.memory_space<vmem>>, vector<8x32xf32>
    %c0_2 = arith.constant 0 : index
    %c0_3 = arith.constant 0 : index
    %4 = vector.load %arg3[%c0_2, %c0_3] : memref<8x32xf32, #tpu.memory_space<vmem>>, vector<8x32xf32>
    %c0_4 = arith.constant 0 : index
    %c0_5 = arith.constant 0 : index
    %5 = vector.load %arg4[%c0_4, %c0_5] : memref<8x32xf32, #tpu.memory_space<vmem>>, vector<8x32xf32>
    %6 = arith.subf %3, %4 : vector<8x32xf32>
    %cst = arith.constant 9.99999997E-7 : f32
    %7 = vector.broadcast %cst : f32 to vector<8x32xf32>
    %8 = arith.addf %6, %7 : vector<8x32xf32>
    %9 = arith.subf %3, %5 : vector<8x32xf32>
    %cst_6 = arith.constant 9.99999997E-7 : f32
    %10 = vector.broadcast %cst_6 : f32 to vector<8x32xf32>
    %11 = arith.addf %9, %10 : vector<8x32xf32>
    %12 = arith.mulf %8, %8 : vector<8x32xf32>
    %cst_7 = arith.constant dense<0.000000e+00> : vector<8xf32>
    %13 = vector.multi_reduction <add>, %12, %cst_7 [1] : vector<8x32xf32> to vector<8xf32>
    %14 = vector.shape_cast %13 : vector<8xf32> to vector<8x1xf32>
    %cst_8 = arith.constant 5.000000e-01 : f32
    %15 = vector.broadcast %cst_8 : f32 to vector<8x1xf32>
    %16 = arith.mulf %15, %14 : vector<8x1xf32>
    %17 = arith.mulf %11, %11 : vector<8x32xf32>
    %cst_9 = arith.constant dense<0.000000e+00> : vector<8xf32>
    %18 = vector.multi_reduction <add>, %17, %cst_9 [1] : vector<8x32xf32> to vector<8xf32>
    %19 = vector.shape_cast %18 : vector<8xf32> to vector<8x1xf32>
    %20 = math.sqrt %19 : vector<8x1xf32>
    %cst_10 = arith.constant 1.000000e+00 : f32
    %21 = vector.broadcast %cst_10 : f32 to vector<8x1xf32>
    %22 = arith.subf %21, %20 : vector<8x1xf32>
    %cst_11 = arith.constant 0.000000e+00 : f32
    %23 = vector.broadcast %cst_11 : f32 to vector<8x1xf32>
    %24 = arith.maximumf %22, %23 : vector<8x1xf32>
    %cst_12 = arith.constant 5.000000e-01 : f32
    %25 = vector.broadcast %cst_12 : f32 to vector<8x1xf32>
    %26 = arith.mulf %25, %24 : vector<8x1xf32>
    %27 = arith.mulf %26, %24 : vector<8x1xf32>
    %28 = arith.addf %16, %27 : vector<8x1xf32>
    %c0_13 = arith.constant 0 : index
    %c0_14 = arith.constant 0 : index
    %29 = vector.load %arg5[%c0_13, %c0_14] : memref<8x1xf32, #tpu.memory_space<vmem>>, vector<8x1xf32>
    %30 = arith.addf %29, %28 : vector<8x1xf32>
    %c0_15 = arith.constant 0 : index
    %c0_16 = arith.constant 0 : index
    %31 = vector.load %arg5[%c0_15, %c0_16] : memref<8x1xf32, #tpu.memory_space<vmem>>, vector<8x1xf32>
    tpu.vector_store %arg5[%c0_15, %c0_16], %30 {strides = array<i32>} : memref<8x1xf32, #tpu.memory_space<vmem>>, vector<8x1xf32>,
    return
  }
  func.func @transform_0(%arg0: i32, %arg1: i32) -> (i32, i32) {
    %c1_i32 = arith.constant 1 : i32
    %0 = arith.muli %arg0, %c1_i32 : i32
    %1 = arith.addi %0, %arg1 : i32
    %c0_i32 = arith.constant 0 : i32
    %2 = arith.minsi %1, %c0_i32 : i32
    %c0_i32_0 = arith.constant 0 : i32
    %c0_i32_1 = arith.constant 0 : i32
    return %2, %c0_i32_0 : i32, i32
  }
  func.func @transform_1(%arg0: i32, %arg1: i32) -> (i32, i32) {
    %c1_i32 = arith.constant 1 : i32
    %0 = arith.muli %arg0, %c1_i32 : i32
    %1 = arith.addi %0, %arg1 : i32
    %c0_i32 = arith.constant 0 : i32
    %2 = arith.minsi %1, %c0_i32 : i32
    %c0_i32_0 = arith.constant 0 : i32
    %c0_i32_1 = arith.constant 0 : i32
    return %2, %c0_i32_0 : i32, i32
  }
  func.func @transform_2(%arg0: i32, %arg1: i32) -> (i32, i32) {
    %c1_i32 = arith.constant 1 : i32
    %0 = arith.muli %arg0, %c1_i32 : i32
    %1 = arith.addi %0, %arg1 : i32
    %c0_i32 = arith.constant 0 : i32
    %2 = arith.minsi %1, %c0_i32 : i32
    %c0_i32_0 = arith.constant 0 : i32
    %c0_i32_1 = arith.constant 0 : i32
    return %2, %c0_i32_0 : i32, i32
  }
  func.func @transform_3(%arg0: i32, %arg1: i32) -> (i32, i32) {
    %c0_i32 = arith.constant 0 : i32
    %c0_i32_0 = arith.constant 0 : i32
    return %arg0, %c0_i32 : i32, i32
  }
}

</mosaic_0001>

<llo_original>
// kernel: tpu_custom_call.1
$region0: #{tpu_custom_call.1}
  #allocation0 [shape = 'u32[]', space=smem, size = 0x4, offset = 0x4, fixed_abs, tag = 'smem constant byte address 0x4 - core index']
  #allocation1 [shape = 'u32[144,128]{1,0:T(1,128)}', space=vmem, size = 0x12000, scoped, tag = 'internal scratch']
  %s0 = inlined_call_operand.hbm [shape: f32[8,32], index: 0, kind: input, shape index: {}]
  %s1 = inlined_call_operand.hbm [shape: f32[8,32], index: 1, kind: input, shape index: {}]
  %s2 = inlined_call_operand.hbm [shape: f32[8,32], index: 2, kind: input, shape index: {}]
  %s3 = inlined_call_operand.vmem [shape: f32[8,1], index: 3, kind: output, shape index: {}]
  %s4 = sld [smem:[#allocation0]]
  $region38: #{tpu_custom_call.1} parent=0
    _
  %s6 = ssub.s32 1, %s4
  %s7 = scalar_select 0, %s6, %s4
  $region1: #{tpu_custom_call.1} parent=0
    #allocation2 [shape = 'u8[4096]{0}', space=vmem, size = 0x1000, scoped, tag = 'input window, operand 0, single buffered']
    #allocation3 [shape = 's32[1]{0}', space=sflag, size = 0x4, scoped, tag = 'scoped memory for tpu_custom_call.1']
    #allocation4 [shape = 'u8[4096]{0}', space=vmem, size = 0x1000, scoped, tag = 'input window, operand 1, single buffered']
    #allocation5 [shape = 's32[1]{0}', space=sflag, size = 0x4, scoped, tag = 'scoped memory for tpu_custom_call.1']
    #allocation6 [shape = 'u8[4096]{0}', space=vmem, size = 0x1000, scoped, tag = 'input window, operand 2, single buffered']
    %8 = vsyncpa [#allocation3], 0
    %9 = vsyncpa [#allocation5], 0
    // Predicated region
    $region2: #{tpu_custom_call.1} parent=1 // pred_check
      _
    $region3: #{tpu_custom_call.1} parent=1 // pred_check_branch
      %11 = sbr.rel (0) target = $region5
    $region4: #{tpu_custom_call.1} parent=1 // pred_region
      %s12 = sadd.s32 0, 0
      %p13 = scmp.lt.s32.totalorder %s12, 0
      %s14 = scalar_select %p13, %s12, 0
      %s16 = ssub.s32 128, 128
      %17 = vsyncadd [#allocation3], %s16
      %s18 = smul.addr %s14, 128
      %s19 = scalar_lea.hbm %s0, %s18
      %s21 = sshll.u32 [#allocation2], 4
      %s22 = int_to_ptr.vmem [resolvable:$true] %s21
      %24 = dma.hbm_to_vmem [thread:$0]  %s19, 128, %s22, [#allocation3]
    $region5: #{tpu_custom_call.1} parent=1 // pred_fallthru
      _
    // Predicated region
    $region6: #{tpu_custom_call.1} parent=1 // pred_check
      _
    $region7: #{tpu_custom_call.1} parent=1 // pred_check_branch
      %26 = sbr.rel (0) target = $region9
    $region8: #{tpu_custom_call.1} parent=1 // pred_region
      %s27 = sadd.s32 0, 0
      %p28 = scmp.lt.s32.totalorder %s27, 0
      %s29 = scalar_select %p28, %s27, 0
      %s31 = ssub.s32 128, 128
      %32 = vsyncadd [#allocation5], %s31
      %s33 = smul.addr %s29, 128
      %s34 = scalar_lea.hbm %s1, %s33
      %s36 = sshll.u32 [#allocation4], 4
      %s37 = int_to_ptr.vmem [resolvable:$true] %s36
      %39 = dma.hbm_to_vmem [thread:$0]  %s34, 128, %s37, [#allocation5]
    $region9: #{tpu_custom_call.1} parent=1 // pred_fallthru
      _
    // Predicated region
    $region10: #{tpu_custom_call.1} parent=1 // pred_check
      _
    $region11: #{tpu_custom_call.1} parent=1 // pred_check_branch
      %41 = sbr.rel (0) target = $region13
    $region12: #{tpu_custom_call.1} parent=1 // pred_region
      %s42 = sadd.s32 0, 0
      %p43 = scmp.lt.s32.totalorder %s42, 0
      %s44 = scalar_select %p43, %s42, 0
      %s46 = ssub.s32 128, 128
      %47 = vsyncadd [#allocation5], %s46
      %s48 = smul.addr %s44, 128
      %s49 = scalar_lea.hbm %s2, %s48
      %s51 = sshll.u32 [#allocation6], 4
      %s52 = int_to_ptr.vmem [resolvable:$true] %s51
      %54 = dma.hbm_to_vmem [thread:$0]  %s49, 128, %s52, [#allocation5]
    $region13: #{tpu_custom_call.1} parent=1 // pred_fallthru
      _
    // Predicated region
    $region14: #{tpu_custom_call.1} parent=1 // pred_check
      _
    $region15: #{tpu_custom_call.1} parent=1 // pred_check_branch
      %56 = sbr.rel (0) target = $region17
    $region16: #{tpu_custom_call.1} parent=1 // pred_region
      %57 = dma.done [#allocation3], 128
    $region17: #{tpu_custom_call.1} parent=1 // pred_fallthru
      _
    // Predicated region
    $region18: #{tpu_custom_call.1} parent=1 // pred_check
      _
    $region19: #{tpu_custom_call.1} parent=1 // pred_check_branch
      %59 = sbr.rel (0) target = $region21
    $region20: #{tpu_custom_call.1} parent=1 // pred_region
      %60 = dma.done [#allocation5], 128
    $region21: #{tpu_custom_call.1} parent=1 // pred_fallthru
      _
    // Predicated region
    $region22: #{tpu_custom_call.1} parent=1 // pred_check
      _
    $region23: #{tpu_custom_call.1} parent=1 // pred_check_branch
      %62 = sbr.rel (0) target = $region25
    $region24: #{tpu_custom_call.1} parent=1 // pred_region
      %63 = dma.done [#allocation5], 128
    $region25: #{tpu_custom_call.1} parent=1 // pred_fallthru
      _
    %s64 = sadd.s32 0, 0
    %p65 = scmp.lt.s32.totalorder %s64, 0
    %s66 = scalar_select %p65, %s64, 0
    %s67 = sadd.s32 0, 0
    %p68 = scmp.lt.s32.totalorder %s67, 0
    %s69 = scalar_select %p68, %s67, 0
    %s70 = sadd.s32 0, 0
    %p71 = scmp.lt.s32.totalorder %s70, 0
    %s72 = scalar_select %p71, %s70, 0
    %p73 = scmp.eq.s32.totalorder 0, 0
    // Predicated region
    $region26: #{tpu_custom_call.1} parent=1 // pred_check
      %p74 = pneg %p73
    $region27: #{tpu_custom_call.1} parent=1 // pred_check_branch
      %76 = sbr.rel (%p74) target = $region29
    $region28: #{tpu_custom_call.1} parent=1 // pred_region
      %vm77 = vcmask 7168
      %78 = vst.msk [vmem:[%s3] sm:$0xff] %vm77, 0.0
    $region29: #{tpu_custom_call.1} parent=1 // pred_fallthru
      _
    %v79 = vld [vmem:[#allocation2] sm:$0xff]
    %v80 = vld [vmem:[#allocation4] sm:$0xff]
    %v81 = vld [vmem:[#allocation6] sm:$0xff]
    %v82 = vsub.f32 %v79, %v80
    %v83 = vadd.f32 %v82, 1e-06
    %v84 = vsub.f32 %v79, %v81
    %v85 = vadd.f32 %v84, 1e-06
    %v86 = vmul.f32 %v83, %v83
    %vm87 = vcmask 261120
    %v88 = vsel %vm87, %v86, 0.0
    %89 = vadd.xlane.f32.xlu0 %v88
    %v90 = vpop.xlane.xlu0 %89
    %v91 = vmul.f32 %v90, 0.5
    %v92 = vmul.f32 %v85, %v85
    %v93 = vsel %vm87, %v92, 0.0
    %94 = vadd.xlane.f32.xlu0 %v93
    %v95 = vpop.xlane.xlu0 %94
    %v96 = vrsqrt.pop %v95
    %v97 = vmul.f32 %v95, %v96
    %vm98 = vcmp.eq.f32.partialorder %v95, inf
    %v99 = vsel %vm98, %v95, %v97
    %vm100 = vcmp.eq.f32.partialorder %v95, 0.0
    %v101 = vand.u32 %v95, 2147483648
    %v102 = vsel %vm100, %v101, %v99
    %v103 = vsub.f32 1.0, %v102
    %v104 = vmax.f32 %v103, 0.0
    %v105 = vmul.f32 %v104, 0.5
    %v106 = vmul.f32 %v105, %v104
    %v107 = vadd.f32 %v91, %v106
    %v108 = vld [vmem:[%s3] sm:$0xff]
    %v109 = vadd.f32 %v108, %v107
    %vm110 = vcmask 7168
    %111 = vst.msk [vmem:[%s3] sm:$0xff] %vm110, %v109
    // Predicated region
    $region30: #{tpu_custom_call.1} parent=1 // pred_check
      _
    $region31: #{tpu_custom_call.1} parent=1 // pred_check_branch
      %113 = sbr.rel (0) target = $region33
    $region32: #{tpu_custom_call.1} parent=1 // pred_region
      _
    $region33: #{tpu_custom_call.1} parent=1 // pred_fallthru
      _
    // Predicated region
    $region34: #{tpu_custom_call.1} parent=1 // pred_check
      _
    $region35: #{tpu_custom_call.1} parent=1 // pred_check_branch
      %115 = sbr.rel (0) target = $region37
    $region36: #{tpu_custom_call.1} parent=1 // pred_region
      _
    $region37: #{tpu_custom_call.1} parent=1 // pred_fallthru
      _
    %116 = vsyncpa [#allocation3], 1
    %117 = vsyncpa [#allocation5], 1

</llo_original>
